<compile_context>
chip_gen: v5e
topology: v5e:2x2
jax: 0.10.0
libtpu: 0.0.40
codegen_flags: <defaults>
</compile_context>

<pallas_src>
from typing import NamedTuple

import jax
import jax.numpy as jnp
from jax.experimental import pallas as pl
from jax.experimental.pallas import tpu as pltpu

_LANE = 128


def _round_up(x, m):
    return ((x + m - 1) // m) * m


# --------------------------------------------------------------------------
# Kernel: fused 3-layer MLP with Tanh — the entire ODE-gradient hot path.
# --------------------------------------------------------------------------
def _ode_grad_kernel(y_ref, w1_ref, b1_ref, w2_ref, b2_ref, w3_ref, b3_ref,
                     o_ref):
    y = y_ref[...].astype(w1_ref.dtype)
    h = jnp.tanh(
        jnp.dot(y, w1_ref[...], preferred_element_type=jnp.float32)
        + b1_ref[...])
    h = jnp.tanh(
        jnp.dot(h.astype(w2_ref.dtype), w2_ref[...],
                preferred_element_type=jnp.float32)
        + b2_ref[...])
    g = (jnp.dot(h.astype(w3_ref.dtype), w3_ref[...],
                 preferred_element_type=jnp.float32)
         + b3_ref[...])
    o_ref[...] = g.astype(o_ref.dtype)


# --------------------------------------------------------------------------
# Parameter preparation (do ONCE, outside the ODE-solver loop).
# --------------------------------------------------------------------------
class PreparedODEParams(NamedTuple):
    w1: jax.Array   # (L,  Hp)   -- input dim NOT padded
    b1: jax.Array   # (1,  Hp)   f32
    w2: jax.Array   # (Hp, Hp)
    b2: jax.Array   # (1,  Hp)   f32
    w3: jax.Array   # (Hp, Lop)  (sign folded in)
    b3: jax.Array   # (1,  Lop)  f32 (sign folded in)
    out_dim: int    # unpadded output dim of the gradient net


def _pad2(a, rows, cols):
    return jnp.pad(a, ((0, rows - a.shape[0]), (0, cols - a.shape[1])))


def _pad_cols(a, cols):
    a = a.reshape(1, -1) if a.ndim == 1 else a
    return jnp.pad(a, ((0, 0), (0, cols - a.shape[-1])))


def prepare_ode_func_params(params, *, backwards=False, lane=_LANE,
                            dtype=jnp.float32):
    """Pad weight *output* dims to multiples of `lane` (lane-dense stores) and
    fold the optional `backwards` negation into the last layer.  Zero weight
    columns + zero bias keep padded lanes exactly 0 through tanh, so results
    are bit-identical after slicing the padding off."""
    w1, b1, w2, b2, w3, b3 = params
    _, H = w1.shape
    out_dim = w3.shape[1]
    Hp, Lop = _round_up(H, lane), _round_up(out_dim, lane)
    sign = -1.0 if backwards else 1.0

    w1p = _pad2(w1, w1.shape[0], Hp).astype(dtype)        # no input-dim pad
    b1p = _pad_cols(b1, Hp).astype(jnp.float32)
    w2p = _pad2(w2, Hp, Hp).astype(dtype)
    b2p = _pad_cols(b2, Hp).astype(jnp.float32)
    w3p = (sign * _pad2(w3, Hp, Lop)).astype(dtype)
    b3p = (sign * _pad_cols(b3, Lop)).astype(jnp.float32)
    return PreparedODEParams(w1p, b1p, w2p, b2p, w3p, b3p, out_dim)


# --------------------------------------------------------------------------
# Tiling / VMEM policy.
# --------------------------------------------------------------------------
def _choose_block_b(B, block_b):
    """Power-of-two bucketed batch tile (bounded set of compiles as B varies).
    For large batches, ensure >= 2 grid blocks so the 'parallel' axis can be
    sharded across both v7x TensorCores."""
    bb = 8
    while bb < min(B, block_b):
        bb *= 2
    if B > 256 and pl.cdiv(B, bb) < 2:
        bb //= 2
    return max(bb, 8)


def _vmem_limit_bytes(bb, L, Hp, Lop, param_bytes):
    f32 = 4
    # double-buffered y / out tiles + f32 intermediates (h, h2, g) + params
    need = 2 * bb * L * f32 + 2 * bb * Lop * f32 + 3 * bb * Hp * f32
    need += 2 * param_bytes
    need = int(2 * need)                       # headroom for layout copies
    return max(min(need, 64 << 20), 16 << 20)  # safe on v5e/v6e/v7x


# --------------------------------------------------------------------------
# Forward wrappers.
# --------------------------------------------------------------------------
def ode_func_forward(t_local, y, prepared, *, block_b=1024):
    """Pallas equivalent of ODEFunc.forward(t_local, y, backwards).

    t_local is accepted for API parity but (as in the PyTorch module) unused.
    `prepared` must come from prepare_ode_func_params (output dims padded, and
    `backwards` already folded in if desired)."""
    del t_local  # unused, matches get_ode_gradient_nn semantics
    w1, b1, w2, b2, w3, b3, out_dim = prepared
    B, L = y.shape
    assert L == w1.shape[0], "latent dim mismatch with prepared params"
    Hp = w1.shape[1]
    Lop = w3.shape[1]

    bb = _choose_block_b(B, block_b)
    grid = (pl.cdiv(B, bb),)   # ragged last block is clipped by Pallas

    param_bytes = sum(int(a.size) * a.dtype.itemsize
                      for a in (w1, b1, w2, b2, w3, b3))
    vmem_limit = _vmem_limit_bytes(bb, L, Hp, Lop, param_bytes)

    out = pl.pallas_call(
        _ode_grad_kernel,
        out_shape=jax.ShapeDtypeStruct((B, Lop), y.dtype),
        grid=grid,
        in_specs=[
            # y: batch-tiled, feature dim left unpadded (== full array dim).
            pl.BlockSpec((bb, L), lambda i: (i, 0)),
            # grid-invariant weights/biases: constant block index -> DMA'd once.
            pl.BlockSpec((L, Hp), lambda i: (0, 0)),
            pl.BlockSpec((1, Hp), lambda i: (0, 0)),
            pl.BlockSpec((Hp, Hp), lambda i: (0, 0)),
            pl.BlockSpec((1, Hp), lambda i: (0, 0)),
            pl.BlockSpec((Hp, Lop), lambda i: (0, 0)),
            pl.BlockSpec((1, Lop), lambda i: (0, 0)),
        ],
        out_specs=pl.BlockSpec((bb, Lop), lambda i: (i, 0)),
        compiler_params=pltpu.CompilerParams(
            dimension_semantics=("parallel",),
            vmem_limit_bytes=vmem_limit),
    )(y, w1, b1, w2, b2, w3, b3)

    # Slice off lane padding only if there is any (skip the extra copy when the
    # output dim is already lane-dense).
    return out if out_dim == Lop else out[:, :out_dim]


def ode_func_forward_stages(t_locals, ys, prepared, *, block_b=1024):
    """Evaluate the gradient net at several solver stages / time points with a
    SINGLE pallas_call by stacking them along the batch axis (amortizes
    dispatch overhead, raises the MXU M dim).  ys: (S, B, L) -> (S, B, out)."""
    del t_locals  # unused by the network
    S, B, L = ys.shape
    flat = ode_func_forward(None, ys.reshape(S * B, L), prepared,
                            block_b=block_b)
    return flat.reshape(S, B, -1)


# --------------------------------------------------------------------------
# Init + pure-JAX reference.
# --------------------------------------------------------------------------
def init_ode_func_params(key, latent_dim, hidden_dim, dtype=jnp.float32):
    """Re-implementation of utils.init_network_weights: W ~ N(0, 0.1), b = 0."""
    k1, k2, k3 = jax.random.split(key, 3)
    std = 0.1
    w1 = std * jax.random.normal(k1, (latent_dim, hidden_dim), dtype)
    b1 = jnp.zeros((1, hidden_dim), dtype)
    w2 = std * jax.random.normal(k2, (hidden_dim, hidden_dim), dtype)
    b2 = jnp.zeros((1, hidden_dim), dtype)
    w3 = std * jax.random.normal(k3, (hidden_dim, latent_dim), dtype)
    b3 = jnp.zeros((1, latent_dim), dtype)
    return (w1, b1, w2, b2, w3, b3)


def _reference_forward(y, params, backwards=False):
    w1, b1, w2, b2, w3, b3 = params
    h = jnp.tanh(y @ w1 + b1)
    h = jnp.tanh(h @ w2 + b2)
    g = h @ w3 + b3
    return -g if backwards else g


if __name__ == "__main__":
    key = jax.random.PRNGKey(0)
    k_params, k_y, k_y2, k_stage = jax.random.split(key, 4)

    batch = 16
    latent_dim = 32   # input_dim == latent_dim for the ODE gradient net
    hidden_dim = 64

    params = init_ode_func_params(k_params, latent_dim, hidden_dim)
    y = jax.random.normal(k_y, (batch, latent_dim), jnp.float32)
    t_local = jnp.float32(0.5)  # unused by the network, kept for API parity

    # Forward (dy/dt) path.
    fwd_params = prepare_ode_func_params(params, backwards=False)
    grad = jax.block_until_ready(ode_func_forward(t_local, y, fwd_params))
    ref = _reference_forward(y, params, backwards=False)
    assert grad.shape == (batch, latent_dim)
    assert jnp.allclose(grad, ref, atol=1e-5, rtol=1e-5), "mismatch vs reference"

    # Backwards path: negation folded into the prepared parameters.
    bwd_params = prepare_ode_func_params(params, backwards=True)
    grad_bwd = jax.block_until_ready(ode_func_forward(t_local, y, bwd_params))
    assert jnp.allclose(grad_bwd, -ref, atol=1e-5, rtol=1e-5)

    # Ragged batch: handled by a cdiv grid with a clipped last block (no pad).
    y_odd = jax.random.normal(k_y2, (batch + 3, latent_dim), jnp.float32)
    grad_odd = jax.block_until_ready(ode_func_forward(t_local, y_odd, fwd_params))
    assert jnp.allclose(grad_odd, _reference_forward(y_odd, params),
                        atol=1e-5, rtol=1e-5)

    # Stage-stacked call: 4 RK-style evaluation points fused into one dispatch.
    ys = jax.random.normal(k_stage, (4, batch, latent_dim), jnp.float32)
    grads = jax.block_until_ready(ode_func_forward_stages(None, ys, fwd_params))
    ref_stages = _reference_forward(ys.reshape(-1, latent_dim),
                                    params).reshape(4, batch, latent_dim)
    assert grads.shape == (4, batch, latent_dim)
    assert jnp.allclose(grads, ref_stages, atol=1e-5, rtol=1e-5)

    print("KERNEL_OK")
</pallas_src>

<mosaic_0001>
module attributes {stable_mosaic.version = 11 : i64} {
  func.func @_ode_grad_kernel(%arg0: i32, %arg1: memref<16x32xf32, #tpu.memory_space<vmem>>, %arg2: memref<32x128xf32, #tpu.memory_space<vmem>>, %arg3: memref<1x128xf32, #tpu.memory_space<vmem>>, %arg4: memref<128x128xf32, #tpu.memory_space<vmem>>, %arg5: memref<1x128xf32, #tpu.memory_space<vmem>>, %arg6: memref<128x128xf32, #tpu.memory_space<vmem>>, %arg7: memref<1x128xf32, #tpu.memory_space<vmem>>, %arg8: memref<16x128xf32, #tpu.memory_space<vmem>>) attributes {dimension_semantics = [#tpu.dimension_semantics<parallel>], iteration_bounds = array<i64: 1>, scalar_prefetch = 0 : i64, scratch_operands = 0 : i64, tpu.core_type = #tpu.core_type<tc>, window_params = [{transform_indices = @transform_0, window_bounds = array<i64: 16, 32>}, {pipeline_mode = #tpu.pipeline_mode<synchronous>, transform_indices = @transform_1, window_bounds = array<i64: 32, 128>}, {pipeline_mode = #tpu.pipeline_mode<synchronous>, transform_indices = @transform_2, window_bounds = array<i64: 1, 128>}, {pipeline_mode = #tpu.pipeline_mode<synchronous>, transform_indices = @transform_3, window_bounds = array<i64: 128, 128>}, {pipeline_mode = #tpu.pipeline_mode<synchronous>, transform_indices = @transform_4, window_bounds = array<i64: 1, 128>}, {pipeline_mode = #tpu.pipeline_mode<synchronous>, transform_indices = @transform_5, window_bounds = array<i64: 128, 128>}, {pipeline_mode = #tpu.pipeline_mode<synchronous>, transform_indices = @transform_6, window_bounds = array<i64: 1, 128>}, {transform_indices = @transform_7, window_bounds = array<i64: 16, 128>}]} {
    %c0 = arith.constant 0 : index
    %c0_0 = arith.constant 0 : index
    %0 = vector.load %arg1[%c0, %c0_0] : memref<16x32xf32, #tpu.memory_space<vmem>>, vector<16x32xf32>
    %c0_1 = arith.constant 0 : index
    %c0_2 = arith.constant 0 : index
    %1 = vector.load %arg2[%c0_1, %c0_2] : memref<32x128xf32, #tpu.memory_space<vmem>>, vector<32x128xf32>
    %cst = arith.constant dense<0.000000e+00> : vector<16x128xf32>
    %2 = tpu.matmul %0, %1, %cst {dimension_numbers = #tpu.dot_dimension_numbers<[1], [0], [0], [1], [0, 0, 1, 1], [], []>} : vector<16x32xf32>, vector<32x128xf32>, vector<16x128xf32> -> vector<16x128xf32>
    %c0_3 = arith.constant 0 : index
    %c0_4 = arith.constant 0 : index
    %3 = vector.load %arg3[%c0_3, %c0_4] : memref<1x128xf32, #tpu.memory_space<vmem>>, vector<1x128xf32>
    %4 = vector.broadcast %3 : vector<1x128xf32> to vector<16x128xf32>
    %5 = arith.addf %2, %4 : vector<16x128xf32>
    %6 = math.tanh %5 : vector<16x128xf32>
    %c0_5 = arith.constant 0 : index
    %c0_6 = arith.constant 0 : index
    %7 = vector.load %arg4[%c0_5, %c0_6] : memref<128x128xf32, #tpu.memory_space<vmem>>, vector<128x128xf32>
    %cst_7 = arith.constant dense<0.000000e+00> : vector<16x128xf32>
    %8 = tpu.matmul %6, %7, %cst_7 {dimension_numbers = #tpu.dot_dimension_numbers<[1], [0], [0], [1], [0, 0, 1, 1], [], []>} : vector<16x128xf32>, vector<128x128xf32>, vector<16x128xf32> -> vector<16x128xf32>
    %c0_8 = arith.constant 0 : index
    %c0_9 = arith.constant 0 : index
    %9 = vector.load %arg5[%c0_8, %c0_9] : memref<1x128xf32, #tpu.memory_space<vmem>>, vector<1x128xf32>
    %10 = vector.broadcast %9 : vector<1x128xf32> to vector<16x128xf32>
    %11 = arith.addf %8, %10 : vector<16x128xf32>
    %12 = math.tanh %11 : vector<16x128xf32>
    %c0_10 = arith.constant 0 : index
    %c0_11 = arith.constant 0 : index
    %13 = vector.load %arg6[%c0_10, %c0_11] : memref<128x128xf32, #tpu.memory_space<vmem>>, vector<128x128xf32>
    %cst_12 = arith.constant dense<0.000000e+00> : vector<16x128xf32>
    %14 = tpu.matmul %12, %13, %cst_12 {dimension_numbers = #tpu.dot_dimension_numbers<[1], [0], [0], [1], [0, 0, 1, 1], [], []>} : vector<16x128xf32>, vector<128x128xf32>, vector<16x128xf32> -> vector<16x128xf32>
    %c0_13 = arith.constant 0 : index
    %c0_14 = arith.constant 0 : index
    %15 = vector.load %arg7[%c0_13, %c0_14] : memref<1x128xf32, #tpu.memory_space<vmem>>, vector<1x128xf32>
    %16 = vector.broadcast %15 : vector<1x128xf32> to vector<16x128xf32>
    %17 = arith.addf %14, %16 : vector<16x128xf32>
    %c0_15 = arith.constant 0 : index
    %c0_16 = arith.constant 0 : index
    %18 = vector.load %arg8[%c0_15, %c0_16] : memref<16x128xf32, #tpu.memory_space<vmem>>, vector<16x128xf32>
    tpu.vector_store %arg8[%c0_15, %c0_16], %17 {strides = array<i32>} : memref<16x128xf32, #tpu.memory_space<vmem>>, vector<16x128xf32>,
    return
  }
  func.func @transform_0(%arg0: i32) -> (i32, i32) {
    %c0_i32 = arith.constant 0 : i32
    %c0_i32_0 = arith.constant 0 : i32
    return %arg0, %c0_i32 : i32, i32
  }
  func.func @transform_1(%arg0: i32) -> (i32, i32) {
    %c0_i32 = arith.constant 0 : i32
    %c0_i32_0 = arith.constant 0 : i32
    %c0_i32_1 = arith.constant 0 : i32
    return %c0_i32, %c0_i32_0 : i32, i32
  }
  func.func @transform_2(%arg0: i32) -> (i32, i32) {
    %c0_i32 = arith.constant 0 : i32
    %c0_i32_0 = arith.constant 0 : i32
    %c0_i32_1 = arith.constant 0 : i32
    return %c0_i32, %c0_i32_0 : i32, i32
  }
  func.func @transform_3(%arg0: i32) -> (i32, i32) {
    %c0_i32 = arith.constant 0 : i32
    %c0_i32_0 = arith.constant 0 : i32
    %c0_i32_1 = arith.constant 0 : i32
    return %c0_i32, %c0_i32_0 : i32, i32
  }
  func.func @transform_4(%arg0: i32) -> (i32, i32) {
    %c0_i32 = arith.constant 0 : i32
    %c0_i32_0 = arith.constant 0 : i32
    %c0_i32_1 = arith.constant 0 : i32
    return %c0_i32, %c0_i32_0 : i32, i32
  }
  func.func @transform_5(%arg0: i32) -> (i32, i32) {
    %c0_i32 = arith.constant 0 : i32
    %c0_i32_0 = arith.constant 0 : i32
    %c0_i32_1 = arith.constant 0 : i32
    return %c0_i32, %c0_i32_0 : i32, i32
  }
  func.func @transform_6(%arg0: i32) -> (i32, i32) {
    %c0_i32 = arith.constant 0 : i32
    %c0_i32_0 = arith.constant 0 : i32
    %c0_i32_1 = arith.constant 0 : i32
    return %c0_i32, %c0_i32_0 : i32, i32
  }
  func.func @transform_7(%arg0: i32) -> (i32, i32) {
    %c0_i32 = arith.constant 0 : i32
    %c0_i32_0 = arith.constant 0 : i32
    return %arg0, %c0_i32 : i32, i32
  }
}

</mosaic_0001>

<llo_original>
// kernel: tpu_custom_call.1
$region0: #{tpu_custom_call.1}
  #allocation0 [shape = 'u32[]', space=smem, size = 0x4, offset = 0x4, fixed_abs, tag = 'smem constant byte address 0x4 - core index']
  #allocation1 [shape = 'u32[72,128]{1,0:T(1,128)}', space=vmem, size = 0x9000, scoped, tag = 'internal scratch']
  %s0 = inlined_call_operand.hbm [shape: f32[16,32], index: 0, kind: input, shape index: {}]
  %s1 = inlined_call_operand.hbm [shape: f32[32,128], index: 1, kind: input, shape index: {}]
  %s2 = inlined_call_operand.vmem [shape: f32[1,128], index: 2, kind: input, shape index: {}]
  %s3 = inlined_call_operand.hbm [shape: f32[128,128], index: 3, kind: input, shape index: {}]
  %s4 = inlined_call_operand.vmem [shape: f32[1,128], index: 4, kind: input, shape index: {}]
  %s5 = inlined_call_operand.hbm [shape: f32[128,128], index: 5, kind: input, shape index: {}]
  %s6 = inlined_call_operand.vmem [shape: f32[1,128], index: 6, kind: input, shape index: {}]
  %s7 = inlined_call_operand.hbm [shape: f32[16,128], index: 7, kind: output, shape index: {}]
  %s8 = sld [smem:[#allocation0]]
  $region54: #{tpu_custom_call.1} parent=0
    _
  %s10 = ssub.s32 1, %s8
  %s11 = scalar_select 0, %s10, %s8
  $region1: #{tpu_custom_call.1} parent=0
    #allocation2 [shape = 'u8[8192]{0}', space=vmem, size = 0x2000, scoped, tag = 'input window, operand 0, single buffered']
    #allocation3 [shape = 's32[1]{0}', space=sflag, size = 0x4, scoped, tag = 'scoped memory for tpu_custom_call.1']
    #allocation4 [shape = 's32[1]{0}', space=sflag, size = 0x4, scoped, tag = 'scoped memory for tpu_custom_call.1']
    #allocation5 [shape = 'u8[16384]{0}', space=vmem, size = 0x4000, scoped, tag = 'input window, operand 1, single buffered']
    #allocation6 [shape = 's32[1]{0}', space=sflag, size = 0x4, scoped, tag = 'scoped memory for tpu_custom_call.1']
    #allocation7 [shape = 'u8[65536]{0}', space=vmem, size = 0x10000, scoped, tag = 'input window, operand 3, single buffered']
    #allocation8 [shape = 'u8[65536]{0}', space=vmem, size = 0x10000, scoped, tag = 'input window, operand 5, single buffered']
    #allocation9 [shape = 's32[1]{0}', space=sflag, size = 0x4, scoped, tag = 'scoped memory for tpu_custom_call.1']
    #allocation10 [shape = 'u8[8192]{0}', space=vmem, size = 0x2000, scoped, tag = 'output window, operand 0, single buffered']
    %12 = vsyncpa [#allocation3], 0
    %13 = vsyncpa [#allocation6], 0
    %14 = vsyncpa [#allocation9], 0
    %15 = vsyncpa [#allocation4], 0
    // Predicated region
    $region2: #{tpu_custom_call.1} parent=1 // pred_check
      _
    $region3: #{tpu_custom_call.1} parent=1 // pred_check_branch
      %17 = sbr.rel (0) target = $region5
    $region4: #{tpu_custom_call.1} parent=1 // pred_region
      %19 = vsyncadd [#allocation3], 0
      %s20 = sshll.u32 %s0, 4
      %s21 = int_to_ptr.hbm [resolvable:$true] %s20
      %s22 = sshll.u32 [#allocation2], 4
      %s23 = int_to_ptr.vmem [resolvable:$true] %s22
      %28 = dma.hbm_to_vmem [thread:$0]  %s21, 256, %s23, [#allocation3], 128, 128, 8
    $region5: #{tpu_custom_call.1} parent=1 // pred_fallthru
      _
    // Predicated region
    $region6: #{tpu_custom_call.1} parent=1 // pred_check
      _
    $region7: #{tpu_custom_call.1} parent=1 // pred_check_branch
      %30 = sbr.rel (0) target = $region9
    $region8: #{tpu_custom_call.1} parent=1 // pred_region
      %32 = vsyncadd [#allocation6], 0
      %s33 = sshll.u32 %s1, 4
      %s34 = int_to_ptr.hbm [resolvable:$true] %s33
      %s35 = sshll.u32 [#allocation5], 4
      %s36 = int_to_ptr.vmem [resolvable:$true] %s35
      %41 = dma.hbm_to_vmem [thread:$0]  %s34, 512, %s36, [#allocation6], 128, 128, 8
    $region9: #{tpu_custom_call.1} parent=1 // pred_fallthru
      _
    // Predicated region
    $region10: #{tpu_custom_call.1} parent=1 // pred_check
      _
    $region11: #{tpu_custom_call.1} parent=1 // pred_check_branch
      %43 = sbr.rel (0) target = $region13
    $region12: #{tpu_custom_call.1} parent=1 // pred_region
      _
    $region13: #{tpu_custom_call.1} parent=1 // pred_fallthru
      _
    // Predicated region
    $region14: #{tpu_custom_call.1} parent=1 // pred_check
      _
    $region15: #{tpu_custom_call.1} parent=1 // pred_check_branch
      %45 = sbr.rel (0) target = $region17
    $region16: #{tpu_custom_call.1} parent=1 // pred_region
      %47 = vsyncadd [#allocation6], 0
      %s48 = sshll.u32 %s3, 4
      %s49 = int_to_ptr.hbm [resolvable:$true] %s48
      %s50 = sshll.u32 [#allocation7], 4
      %s51 = int_to_ptr.vmem [resolvable:$true] %s50
      %56 = dma.hbm_to_vmem [thread:$0]  %s49, 2048, %s51, [#allocation6], 128, 128, 8
    $region17: #{tpu_custom_call.1} parent=1 // pred_fallthru
      _
    // Predicated region
    $region18: #{tpu_custom_call.1} parent=1 // pred_check
      _
    $region19: #{tpu_custom_call.1} parent=1 // pred_check_branch
      %58 = sbr.rel (0) target = $region21
    $region20: #{tpu_custom_call.1} parent=1 // pred_region
      _
    $region21: #{tpu_custom_call.1} parent=1 // pred_fallthru
      _
    // Predicated region
    $region22: #{tpu_custom_call.1} parent=1 // pred_check
      _
    $region23: #{tpu_custom_call.1} parent=1 // pred_check_branch
      %60 = sbr.rel (0) target = $region25
    $region24: #{tpu_custom_call.1} parent=1 // pred_region
      %62 = vsyncadd [#allocation9], 0
      %s63 = sshll.u32 %s5, 4
      %s64 = int_to_ptr.hbm [resolvable:$true] %s63
      %s65 = sshll.u32 [#allocation8], 4
      %s66 = int_to_ptr.vmem [resolvable:$true] %s65
      %71 = dma.hbm_to_vmem [thread:$0]  %s64, 2048, %s66, [#allocation9], 128, 128, 8
    $region25: #{tpu_custom_call.1} parent=1 // pred_fallthru
      _
    // Predicated region
    $region26: #{tpu_custom_call.1} parent=1 // pred_check
      _
    $region27: #{tpu_custom_call.1} parent=1 // pred_check_branch
      %73 = sbr.rel (0) target = $region29
    $region28: #{tpu_custom_call.1} parent=1 // pred_region
      _
    $region29: #{tpu_custom_call.1} parent=1 // pred_fallthru
      _
    // Predicated region
    $region30: #{tpu_custom_call.1} parent=1 // pred_check
      _
    $region31: #{tpu_custom_call.1} parent=1 // pred_check_branch
      %75 = sbr.rel (0) target = $region33
    $region32: #{tpu_custom_call.1} parent=1 // pred_region
      %77 = dma.done [#allocation3], 256
    $region33: #{tpu_custom_call.1} parent=1 // pred_fallthru
      _
    // Predicated region
    $region34: #{tpu_custom_call.1} parent=1 // pred_check
      _
    $region35: #{tpu_custom_call.1} parent=1 // pred_check_branch
      %79 = sbr.rel (0) target = $region37
    $region36: #{tpu_custom_call.1} parent=1 // pred_region
      %81 = dma.done [#allocation6], 512
    $region37: #{tpu_custom_call.1} parent=1 // pred_fallthru
      _
    // Predicated region
    $region38: #{tpu_custom_call.1} parent=1 // pred_check
      _
    $region39: #{tpu_custom_call.1} parent=1 // pred_check_branch
      %83 = sbr.rel (0) target = $region41
    $region40: #{tpu_custom_call.1} parent=1 // pred_region
      %85 = dma.done [#allocation6], 2048
    $region41: #{tpu_custom_call.1} parent=1 // pred_fallthru
      _
    // Predicated region
    $region42: #{tpu_custom_call.1} parent=1 // pred_check
      _
    $region43: #{tpu_custom_call.1} parent=1 // pred_check_branch
      %87 = sbr.rel (0) target = $region45
    $region44: #{tpu_custom_call.1} parent=1 // pred_region
      %89 = dma.done [#allocation9], 2048
    $region45: #{tpu_custom_call.1} parent=1 // pred_fallthru
      _
    %v90 = vld [vmem:[#allocation2] sm:$0xff]
    %v91 = vld [vmem:[#allocation2 + $0x8] sm:$0xff]
    %v92 = vld [vmem:[#allocation5] sm:$0xff]
    %v93 = vld [vmem:[#allocation5 + $0x8] sm:$0xff]
    %v94 = vld [vmem:[#allocation5 + $0x10] sm:$0xff]
    %v95 = vld [vmem:[#allocation5 + $0x18] sm:$0xff]
    %v96 = vld [vmem:[%s2] sm:$0x1]
    %v98 = vperm.slane %v96, 0
    %vm100 = vcmask 261120
    %v102 = vsel %vm100, %v90, 0
    %v105 = vsel %vm100, %v91, 0
    %107 = vmatpush.msra.mxu0 0.0
    %108 = vmatpush.msra.mxu0 0.0
    %109 = vmatpush.msra.mxu0 0.0
    %110 = vmatpush.msra.mxu0 0.0
    %111 = vmatpush.msra.mxu0 0.0
    %112 = vmatpush.msra.mxu0 0.0
    %113 = vmatpush.msra.mxu0 0.0
    %114 = vmatpush.msra.mxu0 0.0
    %115 = vmatpush.msra.mxu0 0.0
    %116 = vmatpush.msra.mxu0 0.0
    %117 = vmatpush.msra.mxu0 0.0
    %118 = vmatpush.msra.mxu0 0.0
    %119 = vmatpush.msra.mxu0 %v95
    %120 = vmatpush.msra.mxu0 %v94
    %121 = vmatpush.msra.mxu0 %v93
    %122 = vmatpush.msra.mxu0 %v92
    %123 = vmatmul.f32.gmra.mxu0 %v102
    %v124 = vpop.f32.mrf.mxu0
    %v125 = vadd.f32 %v98, %v124
    %126 = vmatmul.f32.gmra.mxu0 %v105
    %v127 = vpop.f32.mrf.mxu0
    %v128 = vadd.f32 %v98, %v127
    %129 = vdwg.mxu0
    %v130 = vtanh.pop %v125
    %v131 = vtanh.pop %v128
    %v132 = vld [vmem:[#allocation7] sm:$0xff]
    %v133 = vld [vmem:[#allocation7 + $0x8] sm:$0xff]
    %v134 = vld [vmem:[#allocation7 + $0x10] sm:$0xff]
    %v135 = vld [vmem:[#allocation7 + $0x18] sm:$0xff]
    %v136 = vld [vmem:[#allocation7 + $0x20] sm:$0xff]
    %v137 = vld [vmem:[#allocation7 + $0x28] sm:$0xff]
    %v138 = vld [vmem:[#allocation7 + $0x30] sm:$0xff]
    %v139 = vld [vmem:[#allocation7 + $0x38] sm:$0xff]
    %v140 = vld [vmem:[#allocation7 + $0x40] sm:$0xff]
    %v141 = vld [vmem:[#allocation7 + $0x48] sm:$0xff]
    %v142 = vld [vmem:[#allocation7 + $0x50] sm:$0xff]
    %v143 = vld [vmem:[#allocation7 + $0x58] sm:$0xff]
    %v144 = vld [vmem:[#allocation7 + $0x60] sm:$0xff]
    %v145 = vld [vmem:[#allocation7 + $0x68] sm:$0xff]
    %v146 = vld [vmem:[#allocation7 + $0x70] sm:$0xff]
    %v147 = vld [vmem:[#allocation7 + $0x78] sm:$0xff]
    %v148 = vld [vmem:[%s4] sm:$0x1]
    %v150 = vperm.slane %v148, 0
    %152 = vmatpush.msra.mxu0 %v147
    %153 = vmatpush.msra.mxu0 %v146
    %154 = vmatpush.msra.mxu0 %v145
    %155 = vmatpush.msra.mxu0 %v144
    %156 = vmatpush.msra.mxu0 %v143
    %157 = vmatpush.msra.mxu0 %v142
    %158 = vmatpush.msra.mxu0 %v141
    %159 = vmatpush.msra.mxu0 %v140
    %160 = vmatpush.msra.mxu0 %v139
    %161 = vmatpush.msra.mxu0 %v138
    %162 = vmatpush.msra.mxu0 %v137
    %163 = vmatpush.msra.mxu0 %v136
    %164 = vmatpush.msra.mxu0 %v135
    %165 = vmatpush.msra.mxu0 %v134
    %166 = vmatpush.msra.mxu0 %v133
    %167 = vmatpush.msra.mxu0 %v132
    %168 = vmatmul.f32.gmra.mxu0 %v130
    %v169 = vpop.f32.mrf.mxu0
    %v170 = vadd.f32 %v150, %v169
    %171 = vmatmul.f32.gmra.mxu0 %v131
    %v172 = vpop.f32.mrf.mxu0
    %v173 = vadd.f32 %v150, %v172
    %174 = vdwg.mxu0
    %v175 = vtanh.pop %v170
    %v176 = vtanh.pop %v173
    %v177 = vld [vmem:[#allocation8] sm:$0xff]
    %v178 = vld [vmem:[#allocation8 + $0x8] sm:$0xff]
    %v179 = vld [vmem:[#allocation8 + $0x10] sm:$0xff]
    %v180 = vld [vmem:[#allocation8 + $0x18] sm:$0xff]
    %v181 = vld [vmem:[#allocation8 + $0x20] sm:$0xff]
    %v182 = vld [vmem:[#allocation8 + $0x28] sm:$0xff]
    %v183 = vld [vmem:[#allocation8 + $0x30] sm:$0xff]
    %v184 = vld [vmem:[#allocation8 + $0x38] sm:$0xff]
    %v185 = vld [vmem:[#allocation8 + $0x40] sm:$0xff]
    %v186 = vld [vmem:[#allocation8 + $0x48] sm:$0xff]
    %v187 = vld [vmem:[#allocation8 + $0x50] sm:$0xff]
    %v188 = vld [vmem:[#allocation8 + $0x58] sm:$0xff]
    %v189 = vld [vmem:[#allocation8 + $0x60] sm:$0xff]
    %v190 = vld [vmem:[#allocation8 + $0x68] sm:$0xff]
    %v191 = vld [vmem:[#allocation8 + $0x70] sm:$0xff]
    %v192 = vld [vmem:[#allocation8 + $0x78] sm:$0xff]
    %v193 = vld [vmem:[%s6] sm:$0x1]
    %v195 = vperm.slane %v193, 0
    %197 = vmatpush.msra.mxu0 %v192
    %198 = vmatpush.msra.mxu0 %v191
    %199 = vmatpush.msra.mxu0 %v190
    %200 = vmatpush.msra.mxu0 %v189
    %201 = vmatpush.msra.mxu0 %v188
    %202 = vmatpush.msra.mxu0 %v187
    %203 = vmatpush.msra.mxu0 %v186
    %204 = vmatpush.msra.mxu0 %v185
    %205 = vmatpush.msra.mxu0 %v184
    %206 = vmatpush.msra.mxu0 %v183
    %207 = vmatpush.msra.mxu0 %v182
    %208 = vmatpush.msra.mxu0 %v181
    %209 = vmatpush.msra.mxu0 %v180
    %210 = vmatpush.msra.mxu0 %v179
    %211 = vmatpush.msra.mxu0 %v178
    %212 = vmatpush.msra.mxu0 %v177
    %213 = vmatmul.f32.gmra.mxu0 %v175
    %v214 = vpop.f32.mrf.mxu0
    %v215 = vadd.f32 %v195, %v214
    %216 = vmatmul.f32.gmra.mxu0 %v176
    %v217 = vpop.f32.mrf.mxu0
    %v218 = vadd.f32 %v195, %v217
    %219 = vdwg.mxu0
    %220 = vst [vmem:[#allocation10] sm:$0xff] %v215
    %221 = vst [vmem:[#allocation10 + $0x8] sm:$0xff] %v218
    // Predicated region
    $region46: #{tpu_custom_call.1} parent=1 // pred_check
      _
    $region47: #{tpu_custom_call.1} parent=1 // pred_check_branch
      %223 = sbr.rel (0) target = $region49
    $region48: #{tpu_custom_call.1} parent=1 // pred_region
      %225 = vsyncadd [#allocation4], 0
      %s226 = sshll.u32 [#allocation10], 4
      %s227 = int_to_ptr.vmem [resolvable:$true] %s226
      %s228 = sshll.u32 %s7, 4
      %s229 = int_to_ptr.hbm [resolvable:$true] %s228
      %234 = dma.vmem_to_hbm [thread:$0]  %s227, 256, %s229, [#allocation4], 128, 128, 8
    $region49: #{tpu_custom_call.1} parent=1 // pred_fallthru
      _
    // Predicated region
    $region50: #{tpu_custom_call.1} parent=1 // pred_check
      _
    $region51: #{tpu_custom_call.1} parent=1 // pred_check_branch
      %236 = sbr.rel (0) target = $region53
    $region52: #{tpu_custom_call.1} parent=1 // pred_region
      %238 = dma.done [#allocation4], 256
    $region53: #{tpu_custom_call.1} parent=1 // pred_fallthru
      _
    %239 = vsyncpa [#allocation3], 1
    %240 = vsyncpa [#allocation6], 1
    %241 = vsyncpa [#allocation9], 1
    %242 = vsyncpa [#allocation4], 1

</llo_original>
